<compile_context>
chip_gen: v6e
topology: v6e:2x2x1
jax: 0.10.0
libtpu: 0.0.40
codegen_flags: <defaults>
</compile_context>

<pallas_src>
import functools

import jax
import jax.numpy as jnp
from jax import lax
from jax.experimental import pallas as pl
from jax.experimental.pallas import tpu as pltpu

_LANE = 128
_C_SUB = 64          # channels per vreg-resident partial (~8 vregs @ chunk_w=128)


def _channel_attention_kernel(x_ref, w1t_ref, w2t_ref, o_ref,
                              sum_acc, max_acc, *,
                              chunk_w, full_chunks, last_chunks, inv_hw):
    """One (batch element, spatial slab) grid step.

    x_ref:    (1, C, HW_t) f32   current spatial slab of one batch element
    w1t_ref:  (C, Cr)      f32   conv1.weight[:, :, 0, 0].T  (resident)
    w2t_ref:  (Cr, C)      f32   conv2.weight[:, :, 0, 0].T  (resident)
    o_ref:    (1, 1, C)    f32   written on the last HW step only
    sum_acc / max_acc: (1, C, chunk_w) f32 running elementwise accumulators.

    full_chunks / last_chunks: static tuples of (chunk_index, n_valid_lanes).
    last_chunks is None when H*W divides evenly into spatial tiles.
    """
    hw_step = pl.program_id(1)
    n_hw = pl.num_programs(1)
    c = x_ref.shape[1]

    @pl.when(hw_step == 0)
    def _init():
        sum_acc[...] = jnp.zeros(sum_acc.shape, sum_acc.dtype)
        max_acc[...] = jnp.full(max_acc.shape, -jnp.inf, max_acc.dtype)

    def _accumulate(chunks):
        # Tree-combine all chunks of this slab in vregs (VPU add/max), then do
        # a single read-modify-write of each VMEM accumulator per grid step.
        lane = None
        for c0 in range(0, c, _C_SUB):
            cw = min(_C_SUB, c - c0)
            part_s = None
            part_m = None
            for k, n_valid in chunks:
                ck = x_ref[:, c0:c0 + cw, k * chunk_w:(k + 1) * chunk_w]
                if n_valid < chunk_w:
                    # Only the single chunk straddling H*W is ever masked.
                    if lane is None:
                        lane = lax.broadcasted_iota(
                            jnp.int32, (1, 1, chunk_w), 2)
                    valid = lane < n_valid
                    ck_s = jnp.where(valid, ck, 0.0)
                    ck_m = jnp.where(valid, ck, -jnp.inf)
                else:
                    ck_s = ck
                    ck_m = ck
                part_s = ck_s if part_s is None else part_s + ck_s
                part_m = ck_m if part_m is None else jnp.maximum(part_m, ck_m)
            sum_acc[:, c0:c0 + cw, :] = sum_acc[:, c0:c0 + cw, :] + part_s
            max_acc[:, c0:c0 + cw, :] = jnp.maximum(
                max_acc[:, c0:c0 + cw, :], part_m)

    if last_chunks is None:
        # H*W divides evenly: every step identical, no masking anywhere.
        _accumulate(full_chunks)
    else:
        @pl.when(hw_step < n_hw - 1)
        def _full_steps():
            _accumulate(full_chunks)

        @pl.when(hw_step == n_hw - 1)
        def _last_step():
            _accumulate(last_chunks)

    @pl.when(hw_step == n_hw - 1)
    def _finalize():
        # Single cross-lane reduce, then the tiny fused MLP + sigmoid.
        avg = jnp.sum(sum_acc[...], axis=-1) * inv_hw               # (1, C)
        mx = jnp.max(max_acc[...], axis=-1)                         # (1, C)
        h_a = jnp.maximum(
            jnp.dot(avg, w1t_ref[...], preferred_element_type=jnp.float32), 0.0)
        h_m = jnp.maximum(
            jnp.dot(mx, w1t_ref[...], preferred_element_type=jnp.float32), 0.0)
        y = (jnp.dot(h_a, w2t_ref[...], preferred_element_type=jnp.float32)
             + jnp.dot(h_m, w2t_ref[...], preferred_element_type=jnp.float32))
        o_ref[...] = jnp.reshape(jax.nn.sigmoid(y), o_ref.shape)


def _choose_hw_tile(hw, c, *, budget_bytes=8 * 1024 * 1024, max_lanes=32768):
    """Spatial (lane) tile for the streaming reduction.

    Targets ~8 MiB per pipelined input buffer (amortizes the ~0.35 us/step
    grid overhead at v7x HBM rates) while (a) never exceeding the true H*W
    extent and (b) bounding the in-kernel unroll (<= 256 lane-chunks).
    """
    if hw <= _LANE:
        return hw                                    # full-dim block
    lanes = budget_bytes // (c * 4)
    lanes = max(_LANE, (lanes // _LANE) * _LANE)
    lanes = min(lanes, max_lanes)
    cap = (hw // _LANE) * _LANE                      # stay within the array
    return min(lanes, cap)


def channel_attention(x_nchw, w1, w2, *, hw_tile=None):
    """x_nchw: (N, C, H, W); w1: (Cr, C); w2: (C, Cr). Returns (N, C, 1, 1)."""
    n, c, h, w = x_nchw.shape
    cr = w1.shape[0]
    assert w1.shape == (cr, c) and w2.shape == (c, cr)
    hw = h * w

    x_flat = x_nchw.reshape(n, c, hw).astype(jnp.float32)   # free reshape, no pad

    # ---- spatial tiling (trailing, "arbitrary" reduction axis) ----
    if hw_tile is None:
        hw_tile = _choose_hw_tile(hw, c)
    assert hw_tile == hw or hw_tile % _LANE == 0, \
        "hw_tile must equal H*W or be a multiple of 128"
    grid_hw = pl.cdiv(hw, hw_tile)

    chunk_w = _LANE if hw_tile % _LANE == 0 else hw_tile
    n_chunks = hw_tile // chunk_w

    full_chunks = tuple((k, chunk_w) for k in range(n_chunks))
    rem = hw - (grid_hw - 1) * hw_tile           # valid lanes in the last tile
    if rem == hw_tile:
        last_chunks = None                       # no remainder -> no masking
    else:
        lst = []
        for k in range(n_chunks):
            lo = k * chunk_w
            if lo >= rem:
                break                            # fully OOB chunk: skip the read
            lst.append((k, min(chunk_w, rem - lo)))
        last_chunks = tuple(lst)

    w1t = jnp.asarray(w1, jnp.float32).T         # (C, Cr)
    w2t = jnp.asarray(w2, jnp.float32).T         # (Cr, C)

    kernel = functools.partial(
        _channel_attention_kernel,
        chunk_w=chunk_w, full_chunks=full_chunks, last_chunks=last_chunks,
        inv_hw=1.0 / float(hw))

    out = pl.pallas_call(
        kernel,
        out_shape=jax.ShapeDtypeStruct((n, 1, c), jnp.float32),
        grid_spec=pltpu.PrefetchScalarGridSpec(
            num_scalar_prefetch=0,
            grid=(n, grid_hw),                   # batch leading (parallel), HW last
            in_specs=[
                pl.BlockSpec((1, c, hw_tile), lambda i, j: (i, 0, j)),
                pl.BlockSpec((c, cr), lambda i, j: (0, 0)),   # resident weights
                pl.BlockSpec((cr, c), lambda i, j: (0, 0)),   # resident weights
            ],
            out_specs=pl.BlockSpec((1, 1, c), lambda i, j: (i, 0, 0)),
            scratch_shapes=[
                pltpu.VMEM((1, c, chunk_w), jnp.float32),     # running sum
                pltpu.VMEM((1, c, chunk_w), jnp.float32),     # running max
            ],
        ),
        compiler_params=pltpu.CompilerParams(
            dimension_semantics=("parallel", "arbitrary"),
            vmem_limit_bytes=40 * 1024 * 1024),
    )(x_flat, w1t, w2t)

    return out.reshape(n, c, 1, 1)


def reference(x_nchw, w1, w2):
    """Pure-JAX reference matching the PyTorch forward exactly."""
    n, c, _, _ = x_nchw.shape
    avg = jnp.mean(x_nchw, axis=(2, 3))          # (N, C)
    mx = jnp.max(x_nchw, axis=(2, 3))            # (N, C)

    def mlp(p):
        hdn = jnp.maximum(p @ w1.T, 0.0)         # (N, Cr)
        return hdn @ w2.T                        # (N, C)

    out = jax.nn.sigmoid(mlp(avg) + mlp(mx))
    return out.reshape(n, c, 1, 1)


if __name__ == "__main__":
    key = jax.random.PRNGKey(0)
    k_x1, k_x2, k_x3, k_w1, k_w2 = jax.random.split(key, 5)

    C, RATIO = 64, 16
    CR = C // RATIO
    bound1 = 1.0 / (C ** 0.5)
    bound2 = 1.0 / (CR ** 0.5)
    w1 = jax.random.uniform(k_w1, (CR, C), jnp.float32, -bound1, bound1)
    w2 = jax.random.uniform(k_w2, (C, CR), jnp.float32, -bound2, bound2)

    # 1) Main case (N=2, 16x16=256). Default path (single full slab) and a
    #    forced hw_tile=128 so the multi-step pipelined accumulation runs.
    x1 = jax.random.normal(k_x1, (2, C, 16, 16), dtype=jnp.float32)
    r1 = reference(x1, w1, w2)
    o1a = jax.block_until_ready(channel_attention(x1, w1, w2))
    o1b = jax.block_until_ready(channel_attention(x1, w1, w2, hw_tile=128))
    assert o1a.shape == (2, C, 1, 1)
    assert jnp.allclose(o1a, r1, atol=1e-5, rtol=1e-5), (
        f"max err {float(jnp.max(jnp.abs(o1a - r1)))}")
    assert jnp.allclose(o1b, r1, atol=1e-5, rtol=1e-5), (
        f"max err {float(jnp.max(jnp.abs(o1b - r1)))}")

    # 2) Non-multiple spatial size (13x13=169): remainder masking on the last
    #    HW step only (default chooser picks hw_tile=128 -> grid_hw=2).
    x2 = jax.random.normal(k_x2, (3, C, 13, 13), dtype=jnp.float32)
    o2 = jax.block_until_ready(channel_attention(x2, w1, w2))
    r2 = reference(x2, w1, w2)
    assert jnp.allclose(o2, r2, atol=1e-5, rtol=1e-5), (
        f"max err {float(jnp.max(jnp.abs(o2 - r2)))}")

    # 3) Odd batch (N=5), small spatial (8x8=64): full-dim spatial block,
    #    one batch element per grid step, no padding copies anywhere.
    x3 = jax.random.normal(k_x3, (5, C, 8, 8), dtype=jnp.float32)
    o3 = jax.block_until_ready(channel_attention(x3, w1, w2))
    r3 = reference(x3, w1, w2)
    assert jnp.allclose(o3, r3, atol=1e-5, rtol=1e-5), (
        f"max err {float(jnp.max(jnp.abs(o3 - r3)))}")

    print("KERNEL_OK")
</pallas_src>

<mosaic_0001>
module attributes {stable_mosaic.version = 11 : i64} {
  func.func @_channel_attention_kernel(%arg0: i32, %arg1: i32, %arg2: memref<1x64x256xf32, #tpu.memory_space<vmem>>, %arg3: memref<64x4xf32, #tpu.memory_space<vmem>>, %arg4: memref<4x64xf32, #tpu.memory_space<vmem>>, %arg5: memref<1x1x64xf32, #tpu.memory_space<vmem>>, %arg6: memref<1x64x128xf32, #tpu.memory_space<vmem>>, %arg7: memref<1x64x128xf32, #tpu.memory_space<vmem>>) attributes {dimension_semantics = [#tpu.dimension_semantics<parallel>, #tpu.dimension_semantics<arbitrary>], iteration_bounds = array<i64: 2, 1>, scalar_prefetch = 0 : i64, scratch_operands = 2 : i64, tpu.core_type = #tpu.core_type<tc>, window_params = [{transform_indices = @transform_0, window_bounds = array<i64: 1, 64, 256>}, {pipeline_mode = #tpu.pipeline_mode<synchronous>, transform_indices = @transform_1, window_bounds = array<i64: 64, 4>}, {pipeline_mode = #tpu.pipeline_mode<synchronous>, transform_indices = @transform_2, window_bounds = array<i64: 4, 64>}, {transform_indices = @transform_3, window_bounds = array<i64: 1, 1, 64>}]} {
    %c0_i32 = arith.constant 0 : i32
    %0 = arith.cmpi eq, %arg1, %c0_i32 : i32
    %1 = arith.extui %0 : i1 to i32
    %c0_i32_0 = arith.constant 0 : i32
    %2 = arith.cmpi ne, %1, %c0_i32_0 : i32
    scf.if %2 {
      %cst = arith.constant 0.000000e+00 : f32
      %16 = vector.broadcast %cst : f32 to vector<1x64x128xf32>
      %c0_19 = arith.constant 0 : index
      %c0_20 = arith.constant 0 : index
      %c0_21 = arith.constant 0 : index
      %17 = vector.load %arg6[%c0_19, %c0_20, %c0_21] : memref<1x64x128xf32, #tpu.memory_space<vmem>>, vector<1x64x128xf32>
      tpu.vector_store %arg6[%c0_19, %c0_20, %c0_21], %16 {strides = array<i32>} : memref<1x64x128xf32, #tpu.memory_space<vmem>>, vector<1x64x128xf32>,
      %cst_22 = arith.constant 0xFF800000 : f32
      %18 = vector.broadcast %cst_22 : f32 to vector<1x64x128xf32>
      %c0_23 = arith.constant 0 : index
      %c0_24 = arith.constant 0 : index
      %c0_25 = arith.constant 0 : index
      %19 = vector.load %arg7[%c0_23, %c0_24, %c0_25] : memref<1x64x128xf32, #tpu.memory_space<vmem>>, vector<1x64x128xf32>
      tpu.vector_store %arg7[%c0_23, %c0_24, %c0_25], %18 {strides = array<i32>} : memref<1x64x128xf32, #tpu.memory_space<vmem>>, vector<1x64x128xf32>,
    } else {
    }
    %c0 = arith.constant 0 : index
    %c0_1 = arith.constant 0 : index
    %c0_2 = arith.constant 0 : index
    %3 = vector.load %arg2[%c0, %c0_1, %c0_2] : memref<1x64x256xf32, #tpu.memory_space<vmem>>, vector<1x64x128xf32>
    %c0_3 = arith.constant 0 : index
    %c0_4 = arith.constant 0 : index
    %c128 = arith.constant 128 : index
    %4 = vector.load %arg2[%c0_3, %c0_4, %c128] : memref<1x64x256xf32, #tpu.memory_space<vmem>>, vector<1x64x128xf32>
    %5 = arith.addf %3, %4 : vector<1x64x128xf32>
    %6 = arith.maximumf %3, %4 : vector<1x64x128xf32>
    %c0_5 = arith.constant 0 : index
    %c0_6 = arith.constant 0 : index
    %c0_7 = arith.constant 0 : index
    %7 = vector.load %arg6[%c0_5, %c0_6, %c0_7] : memref<1x64x128xf32, #tpu.memory_space<vmem>>, vector<1x64x128xf32>
    %8 = arith.addf %7, %5 : vector<1x64x128xf32>
    %c0_8 = arith.constant 0 : index
    %c0_9 = arith.constant 0 : index
    %c0_10 = arith.constant 0 : index
    %9 = vector.load %arg6[%c0_8, %c0_9, %c0_10] : memref<1x64x128xf32, #tpu.memory_space<vmem>>, vector<1x64x128xf32>
    tpu.vector_store %arg6[%c0_8, %c0_9, %c0_10], %8 {strides = array<i32>} : memref<1x64x128xf32, #tpu.memory_space<vmem>>, vector<1x64x128xf32>,
    %c0_11 = arith.constant 0 : index
    %c0_12 = arith.constant 0 : index
    %c0_13 = arith.constant 0 : index
    %10 = vector.load %arg7[%c0_11, %c0_12, %c0_13] : memref<1x64x128xf32, #tpu.memory_space<vmem>>, vector<1x64x128xf32>
    %11 = arith.maximumf %10, %6 : vector<1x64x128xf32>
    %c0_14 = arith.constant 0 : index
    %c0_15 = arith.constant 0 : index
    %c0_16 = arith.constant 0 : index
    %12 = vector.load %arg7[%c0_14, %c0_15, %c0_16] : memref<1x64x128xf32, #tpu.memory_space<vmem>>, vector<1x64x128xf32>
    tpu.vector_store %arg7[%c0_14, %c0_15, %c0_16], %11 {strides = array<i32>} : memref<1x64x128xf32, #tpu.memory_space<vmem>>, vector<1x64x128xf32>,
    %c0_i32_17 = arith.constant 0 : i32
    %13 = arith.cmpi eq, %arg1, %c0_i32_17 : i32
    %14 = arith.extui %13 : i1 to i32
    %c0_i32_18 = arith.constant 0 : i32
    %15 = arith.cmpi ne, %14, %c0_i32_18 : i32
    scf.if %15 {
      %c0_19 = arith.constant 0 : index
      %c0_20 = arith.constant 0 : index
      %c0_21 = arith.constant 0 : index
      %16 = vector.load %arg6[%c0_19, %c0_20, %c0_21] : memref<1x64x128xf32, #tpu.memory_space<vmem>>, vector<1x64x128xf32>
      %cst = arith.constant dense<0.000000e+00> : vector<1x64xf32>
      %17 = vector.multi_reduction <add>, %16, %cst [2] : vector<1x64x128xf32> to vector<1x64xf32>
      %cst_22 = arith.constant 3.906250e-03 : f32
      %18 = vector.broadcast %cst_22 : f32 to vector<1x64xf32>
      %19 = arith.mulf %17, %18 : vector<1x64xf32>
      %c0_23 = arith.constant 0 : index
      %c0_24 = arith.constant 0 : index
      %c0_25 = arith.constant 0 : index
      %20 = vector.load %arg7[%c0_23, %c0_24, %c0_25] : memref<1x64x128xf32, #tpu.memory_space<vmem>>, vector<1x64x128xf32>
      %cst_26 = arith.constant dense<0xFF800000> : vector<1x64xf32>
      %21 = vector.multi_reduction <maximumf>, %20, %cst_26 [2] : vector<1x64x128xf32> to vector<1x64xf32>
      %c0_27 = arith.constant 0 : index
      %c0_28 = arith.constant 0 : index
      %22 = vector.load %arg3[%c0_27, %c0_28] : memref<64x4xf32, #tpu.memory_space<vmem>>, vector<64x4xf32>
      %cst_29 = arith.constant dense<0.000000e+00> : vector<1x4xf32>
      %23 = tpu.matmul %19, %22, %cst_29 {dimension_numbers = #tpu.dot_dimension_numbers<[1], [0], [0], [1], [0, 0, 1, 1], [], []>} : vector<1x64xf32>, vector<64x4xf32>, vector<1x4xf32> -> vector<1x4xf32>
      %cst_30 = arith.constant 0.000000e+00 : f32
      %24 = vector.broadcast %cst_30 : f32 to vector<1x4xf32>
      %25 = arith.maximumf %23, %24 : vector<1x4xf32>
      %c0_31 = arith.constant 0 : index
      %c0_32 = arith.constant 0 : index
      %26 = vector.load %arg3[%c0_31, %c0_32] : memref<64x4xf32, #tpu.memory_space<vmem>>, vector<64x4xf32>
      %cst_33 = arith.constant dense<0.000000e+00> : vector<1x4xf32>
      %27 = tpu.matmul %21, %26, %cst_33 {dimension_numbers = #tpu.dot_dimension_numbers<[1], [0], [0], [1], [0, 0, 1, 1], [], []>} : vector<1x64xf32>, vector<64x4xf32>, vector<1x4xf32> -> vector<1x4xf32>
      %cst_34 = arith.constant 0.000000e+00 : f32
      %28 = vector.broadcast %cst_34 : f32 to vector<1x4xf32>
      %29 = arith.maximumf %27, %28 : vector<1x4xf32>
      %c0_35 = arith.constant 0 : index
      %c0_36 = arith.constant 0 : index
      %30 = vector.load %arg4[%c0_35, %c0_36] : memref<4x64xf32, #tpu.memory_space<vmem>>, vector<4x64xf32>
      %cst_37 = arith.constant dense<0.000000e+00> : vector<1x64xf32>
      %31 = tpu.matmul %25, %30, %cst_37 {dimension_numbers = #tpu.dot_dimension_numbers<[1], [0], [0], [1], [0, 0, 1, 1], [], []>} : vector<1x4xf32>, vector<4x64xf32>, vector<1x64xf32> -> vector<1x64xf32>
      %c0_38 = arith.constant 0 : index
      %c0_39 = arith.constant 0 : index
      %32 = vector.load %arg4[%c0_38, %c0_39] : memref<4x64xf32, #tpu.memory_space<vmem>>, vector<4x64xf32>
      %cst_40 = arith.constant dense<0.000000e+00> : vector<1x64xf32>
      %33 = tpu.matmul %29, %32, %cst_40 {dimension_numbers = #tpu.dot_dimension_numbers<[1], [0], [0], [1], [0, 0, 1, 1], [], []>} : vector<1x4xf32>, vector<4x64xf32>, vector<1x64xf32> -> vector<1x64xf32>
      %34 = arith.addf %31, %33 : vector<1x64xf32>
      %35 = arith.negf %34 : vector<1x64xf32>
      %36 = math.exp %35 : vector<1x64xf32>
      %cst_41 = arith.constant 1.000000e+00 : f32
      %37 = vector.broadcast %cst_41 : f32 to vector<1x64xf32>
      %38 = arith.addf %37, %36 : vector<1x64xf32>
      %39 = arith.divf %37, %38 : vector<1x64xf32>
      %40 = vector.shape_cast %39 : vector<1x64xf32> to vector<1x1x64xf32>
      %c0_42 = arith.constant 0 : index
      %c0_43 = arith.constant 0 : index
      %c0_44 = arith.constant 0 : index
      %41 = vector.load %arg5[%c0_42, %c0_43, %c0_44] : memref<1x1x64xf32, #tpu.memory_space<vmem>>, vector<1x1x64xf32>
      tpu.vector_store %arg5[%c0_42, %c0_43, %c0_44], %40 {strides = array<i32>} : memref<1x1x64xf32, #tpu.memory_space<vmem>>, vector<1x1x64xf32>,
    } else {
    }
    return
  }
  func.func @transform_0(%arg0: i32, %arg1: i32) -> (i32, i32, i32) {
    %c0_i32 = arith.constant 0 : i32
    %c0_i32_0 = arith.constant 0 : i32
    return %arg0, %c0_i32, %arg1 : i32, i32, i32
  }
  func.func @transform_1(%arg0: i32, %arg1: i32) -> (i32, i32) {
    %c0_i32 = arith.constant 0 : i32
    %c0_i32_0 = arith.constant 0 : i32
    %c0_i32_1 = arith.constant 0 : i32
    return %c0_i32, %c0_i32_0 : i32, i32
  }
  func.func @transform_2(%arg0: i32, %arg1: i32) -> (i32, i32) {
    %c0_i32 = arith.constant 0 : i32
    %c0_i32_0 = arith.constant 0 : i32
    %c0_i32_1 = arith.constant 0 : i32
    return %c0_i32, %c0_i32_0 : i32, i32
  }
  func.func @transform_3(%arg0: i32, %arg1: i32) -> (i32, i32, i32) {
    %c0_i32 = arith.constant 0 : i32
    %c0_i32_0 = arith.constant 0 : i32
    %c0_i32_1 = arith.constant 0 : i32
    return %arg0, %c0_i32, %c0_i32_0 : i32, i32, i32
  }
}

</mosaic_0001>

<llo_original>
// kernel: tpu_custom_call.1
$region0: #{tpu_custom_call.1}
  #allocation0 [shape = 'u32[]', space=smem, size = 0x4, offset = 0x4, fixed_abs, tag = 'smem constant byte address 0x4 - core index']
  #allocation1 [shape = 'u32[144,128]{1,0:T(1,128)}', space=vmem, size = 0x12000, scoped, tag = 'internal scratch']
  #allocation2 [shape = 'f32[1,64,128]{2,1,0:T(8,128)}', space=vmem, size = 0x8000, scoped, tag = 'scratch operand']
  #allocation3 [shape = 'f32[1,64,128]{2,1,0:T(8,128)}', space=vmem, size = 0x8000, scoped, tag = 'scratch operand']
  %s0 = inlined_call_operand.hbm [shape: f32[2,64,256], index: 0, kind: input, shape index: {}]
  %s1 = inlined_call_operand.vmem [shape: f32[64,4], index: 1, kind: input, shape index: {}]
  %s2 = inlined_call_operand.vmem [shape: f32[4,64], index: 2, kind: input, shape index: {}]
  %s3 = inlined_call_operand.hbm [shape: f32[2,1,64], index: 3, kind: output, shape index: {}]
  %s4 = sld [smem:[#allocation0]]
  $region57: #{tpu_custom_call.1} parent=0
    _
  %s6 = ssub.s32 1, %s4
  %s7 = scalar_select 0, %s6, %s4
  $region1: #{tpu_custom_call.1} parent=0
    #allocation4 [shape = 'u8[131072]{0}', space=vmem, size = 0x20000, scoped, tag = 'input window, operand 0']
    #allocation5 [shape = 's32[2]{0}', space=sflag, size = 0x8, scoped, tag = 'scoped memory for tpu_custom_call.1']
    #allocation6 [shape = 's32[2]{0}', space=sflag, size = 0x8, scoped, tag = 'scoped memory for tpu_custom_call.1']
    #allocation7 [shape = 'u8[1024]{0}', space=vmem, size = 0x400, scoped, tag = 'output window, operand 0']
    %8 = vsyncpa [#allocation5], 0
    %s9 = scalar_lea.sflag [#allocation5], 1
    %10 = vsyncpa %s9, 0
    %11 = vsyncpa [#allocation6], 0
    %s12 = scalar_lea.sflag [#allocation6], 1
    %13 = vsyncpa %s12, 0
    loop: start=0, step=1, limit=4
    $region2: #{tpu_custom_call.1} parent=1 // loop_pre_header
      _
    $region3: #{tpu_custom_call.1} parent=1 // loop_header
      %s15 = sphi 0, %s19
      %p16 = scmp.ge.s32.totalorder %s15, 4
      %s22 = sphi 0, %s34
      %s23 = sphi 0, %s30
      %s24 = sphi 0, %s22
      %s25 = sphi 0, %s23
      %s26 = sphi 0, %s24
      %s27 = sphi 0, %s25
      %s39 = sphi 0, %s41
      %s42 = sphi 0, %s39
      %s43 = sphi 0, %s42
      %s59 = sphi 0, %s43
      %s63 = sphi 0, %s63
      %s65 = sphi 0, %s63
      %s66 = sphi 0, %s65
      %s80 = sphi 0, %s66
      %s84 = sphi 0, %s84
      %s86 = sphi 0, %s84
      %s87 = sphi 0, %s86
      %s101 = sphi 0, %s87
      %s107 = sphi 0, %s109
      %s110 = sphi 0, %s107
      %s111 = sphi 0, %s110
      %s127 = sphi 0, %s111
    $region4: #{tpu_custom_call.1} parent=1 // loop_header_branch
      %18 = sbr.rel (%p16) target = $region8
    $region5: #{tpu_custom_call.1} parent=1 // loop_body
      %s20 = ssub.s32 %s15, 1
      %s21 = ssub.s32 %s15, 2
      %s28 = sadd.s32 1, %s23
      %p29 = scmp.ge.s32.totalorder %s28, 1
      %s30 = scalar_select %p29, 0, %s28
      %s31 = sadd.s32 1, %s22
      %s32 = scalar_select %p29, %s31, %s22
      %p33 = scmp.ge.s32.totalorder %s32, 2
      %s34 = scalar_select %p33, 0, %s32
      %s35 = ssub.s32 %s22, %s34
      %s36 = ssub.s32 %s23, %s30
      %s37 = sor.u32 %s35, %s36
      %p38 = scmp.eq.s32.totalorder %s37, 0
      %s40 = sadd.s32 %s39, 1
      %s41 = scalar_select %p38, %s39, %s40
      %p44 = pneg %p38
      %p45 = scmp.eq.s32.totalorder %s15, 1
      %p46 = por %p44, %p45
      %p47 = scmp.ne.s32.totalorder %s39, %s42
      %p48 = scmp.eq.s32.totalorder %s15, 0
      %p49 = por %p47, %p48
      %p50 = scmp.ne.s32.totalorder %s39, %s42
      %p51 = scmp.eq.s32.totalorder %s20, 1
      %p52 = por %p50, %p51
      %p53 = scmp.ne.s32.totalorder %s42, %s43
      %p54 = scmp.eq.s32.totalorder %s20, 0
      %p55 = por %p53, %p54
      %p56 = scmp.ne.s32.totalorder %s42, %s43
      %p57 = scmp.eq.s32.totalorder %s21, 1
      %p58 = por %p56, %p57
      %p60 = scmp.ne.s32.totalorder %s43, %s59
      %p61 = scmp.eq.s32.totalorder %s21, 0
      %p62 = por %p60, %p61
      %s64 = sadd.s32 %s63, 1
      %p67 = scmp.eq.s32.totalorder %s15, 1
      %p68 = scmp.ne.s32.totalorder %s63, %s65
      %p69 = scmp.eq.s32.totalorder %s15, 0
      %p70 = por %p68, %p69
      %p71 = scmp.ne.s32.totalorder %s63, %s65
      %p72 = scmp.eq.s32.totalorder %s20, 1
      %p73 = por %p71, %p72
      %p74 = scmp.ne.s32.totalorder %s65, %s66
      %p75 = scmp.eq.s32.totalorder %s20, 0
      %p76 = por %p74, %p75
      %p77 = scmp.ne.s32.totalorder %s65, %s66
      %p78 = scmp.eq.s32.totalorder %s21, 1
      %p79 = por %p77, %p78
      %p81 = scmp.ne.s32.totalorder %s66, %s80
      %p82 = scmp.eq.s32.totalorder %s21, 0
      %p83 = por %p81, %p82
      %s85 = sadd.s32 %s84, 1
      %p88 = scmp.eq.s32.totalorder %s15, 1
      %p89 = scmp.ne.s32.totalorder %s84, %s86
      %p90 = scmp.eq.s32.totalorder %s15, 0
      %p91 = por %p89, %p90
      %p92 = scmp.ne.s32.totalorder %s84, %s86
      %p93 = scmp.eq.s32.totalorder %s20, 1
      %p94 = por %p92, %p93
      %p95 = scmp.ne.s32.totalorder %s86, %s87
      %p96 = scmp.eq.s32.totalorder %s20, 0
      %p97 = por %p95, %p96
      %p98 = scmp.ne.s32.totalorder %s86, %s87
      %p99 = scmp.eq.s32.totalorder %s21, 1
      %p100 = por %p98, %p99
      %p102 = scmp.ne.s32.totalorder %s87, %s101
      %p103 = scmp.eq.s32.totalorder %s21, 0
      %p104 = por %p102, %p103
      %s105 = ssub.s32 %s22, %s34
      %p106 = scmp.eq.s32.totalorder %s105, 0
      %s108 = sadd.s32 %s107, 1
      %s109 = scalar_select %p106, %s107, %s108
      %p112 = pneg %p106
      %p113 = scmp.eq.s32.totalorder %s15, 1
      %p114 = por %p112, %p113
      %p115 = scmp.ne.s32.totalorder %s107, %s110
      %p116 = scmp.eq.s32.totalorder %s15, 0
      %p117 = por %p115, %p116
      %p118 = scmp.ne.s32.totalorder %s107, %s110
      %p119 = scmp.eq.s32.totalorder %s20, 1
      %p120 = por %p118, %p119
      %p121 = scmp.ne.s32.totalorder %s110, %s111
      %p122 = scmp.eq.s32.totalorder %s20, 0
      %p123 = por %p121, %p122
      %p124 = scmp.ne.s32.totalorder %s110, %s111
      %p125 = scmp.eq.s32.totalorder %s21, 1
      %p126 = por %p124, %p125
      %p128 = scmp.ne.s32.totalorder %s111, %s127
      %p129 = scmp.eq.s32.totalorder %s21, 0
      %p130 = por %p128, %p129
      %p131 = scmp.le.s32.totalorder 1, %s15
      %p132 = scmp.lt.s32.totalorder %s15, 3
      %p133 = pnand %p131, %p132
      %p134 = pneg %p133
      // Predicated region
      $region9: #{tpu_custom_call.1} parent=5 // pred_check
        _
      $region10: #{tpu_custom_call.1} parent=5 // pred_check_branch
        %136 = sbr.rel (%p133) target = $region12
      $region11: #{tpu_custom_call.1} parent=5 // pred_region
        %s137 = ssub.s32 %s15, 1
        // Predicated region
        $region13: #{tpu_custom_call.1} parent=11 // pred_check
          %p138 = pneg %p76
        $region14: #{tpu_custom_call.1} parent=11 // pred_check_branch
          %140 = sbr.rel (%p138) target = $region16
        $region15: #{tpu_custom_call.1} parent=11 // pred_region
          _
        $region16: #{tpu_custom_call.1} parent=11 // pred_fallthru
          _
        // Predicated region
        $region17: #{tpu_custom_call.1} parent=11 // pred_check
          %p141 = pneg %p97
        $region18: #{tpu_custom_call.1} parent=11 // pred_check_branch
          %143 = sbr.rel (%p141) target = $region20
        $region19: #{tpu_custom_call.1} parent=11 // pred_region
          _
        $region20: #{tpu_custom_call.1} parent=11 // pred_fallthru
          _
      $region12: #{tpu_custom_call.1} parent=5 // pred_fallthru
        _
      %p144 = scmp.lt.s32.totalorder %s15, 2
      // Predicated region
      $region21: #{tpu_custom_call.1} parent=5 // pred_check
        %p145 = pneg %p144
      $region22: #{tpu_custom_call.1} parent=5 // pred_check_branch
        %147 = sbr.rel (%p145) target = $region24
      $region23: #{tpu_custom_call.1} parent=5 // pred_region
        // Predicated region
        $region25: #{tpu_custom_call.1} parent=23 // pred_check
          %p148 = pneg %p49
        $region26: #{tpu_custom_call.1} parent=23 // pred_check_branch
          %150 = sbr.rel (%p148) target = $region28
        $region27: #{tpu_custom_call.1} parent=23 // pred_region
          %s151 = sand.u32 %s39, 1
          %s152 = scalar_lea.sflag [#allocation5], %s151
          %s153 = sand.u32 %s39, 1
          %s154 = smul.addr %s153, 128
          %s155 = scalar_lea.vmem [#allocation4], %s154
          %s156 = smul.u32 2, %s23
          %s158 = ssub.s32 2048, 2048
          %159 = vsyncadd %s152, %s158
          %s160 = smul.addr %s22, 16
          %s161 = sadd.s32 %s156, %s160
          %s162 = smul.addr %s161, 128
          %s163 = scalar_lea.hbm %s0, %s162
          %s164 = sshll.u32 %s155, 4
          %s165 = int_to_ptr.vmem [resolvable:$true] %s164
          %170 = dma.hbm_to_vmem [thread:$0]  %s163, 2048, %s165, %s152, 256, 256, 16
        $region28: #{tpu_custom_call.1} parent=23 // pred_fallthru
          _
      $region24: #{tpu_custom_call.1} parent=5 // pred_fallthru
        _
      %p171 = scmp.le.s32.totalorder 1, %s15
      %p172 = scmp.lt.s32.totalorder %s15, 3
      %p173 = pnand %p171, %p172
      %p174 = pneg %p173
      // Predicated region
      $region29: #{tpu_custom_call.1} parent=5 // pred_check
        _
      $region30: #{tpu_custom_call.1} parent=5 // pred_check_branch
        %176 = sbr.rel (%p173) target = $region32
      $region31: #{tpu_custom_call.1} parent=5 // pred_region
        %s177 = ssub.s32 %s15, 1
        %s178 = sand.u32 %s42, 1
        %s179 = scalar_lea.sflag [#allocation5], %s178
        %s180 = sand.u32 %s42, 1
        %s181 = smul.addr %s180, 128
        %s182 = scalar_lea.vmem [#allocation4], %s181
        // Predicated region
        $region33: #{tpu_custom_call.1} parent=31 // pred_check
          %p183 = pneg %p55
        $region34: #{tpu_custom_call.1} parent=31 // pred_check_branch
          %185 = sbr.rel (%p183) target = $region36
        $region35: #{tpu_custom_call.1} parent=31 // pred_region
          %186 = dma.done %s179, 2048
        $region36: #{tpu_custom_call.1} parent=31 // pred_fallthru
          _
        %s187 = sand.u32 %s42, 1
        %s188 = scalar_lea.sflag [#allocation5], %s187
        %s189 = sand.u32 %s42, 1
        %s190 = smul.addr %s189, 128
        %s191 = scalar_lea.vmem [#allocation4], %s190
        %p192 = pneg %p55
        %p193 = pneg %p52
        %p194 = pneg %p76
        %p195 = pneg %p73
        %p196 = pneg %p97
        %p197 = pneg %p94
        %p198 = pneg %p123
        %p199 = pneg %p120
        %s200 = sand.u32 %s110, 1
        %s201 = scalar_lea.sflag [#allocation6], %s200
        %s202 = sand.u32 %s110, 1
        %s203 = scalar_lea.vmem [#allocation7], %s202
        %s204 = smul.u32 2, %s25
        %p205 = scmp.eq.s32.totalorder %s25, 0
        // Predicated region
        $region37: #{tpu_custom_call.1} parent=31 // pred_check
          %p206 = pneg %p205
        $region38: #{tpu_custom_call.1} parent=31 // pred_check_branch
          %208 = sbr.rel (%p206) target = $region40
        $region39: #{tpu_custom_call.1} parent=31 // pred_region
          %209 = vst [vmem:[#allocation2] sm:$0xff] 0.0
          %210 = vst [vmem:[#allocation2 + $0x8] sm:$0xff] 0.0
          %211 = vst [vmem:[#allocation2 + $0x10] sm:$0xff] 0.0
          %212 = vst [vmem:[#allocation2 + $0x18] sm:$0xff] 0.0
          %213 = vst [vmem:[#allocation2 + $0x20] sm:$0xff] 0.0
          %214 = vst [vmem:[#allocation2 + $0x28] sm:$0xff] 0.0
          %215 = vst [vmem:[#allocation2 + $0x30] sm:$0xff] 0.0
          %216 = vst [vmem:[#allocation2 + $0x38] sm:$0xff] 0.0
          %217 = vst [vmem:[#allocation3] sm:$0xff] -inf
          %218 = vst [vmem:[#allocation3 + $0x8] sm:$0xff] -inf
          %219 = vst [vmem:[#allocation3 + $0x10] sm:$0xff] -inf
          %220 = vst [vmem:[#allocation3 + $0x18] sm:$0xff] -inf
          %221 = vst [vmem:[#allocation3 + $0x20] sm:$0xff] -inf
          %222 = vst [vmem:[#allocation3 + $0x28] sm:$0xff] -inf
          %223 = vst [vmem:[#allocation3 + $0x30] sm:$0xff] -inf
          %224 = vst [vmem:[#allocation3 + $0x38] sm:$0xff] -inf
        $region40: #{tpu_custom_call.1} parent=31 // pred_fallthru
          _
        %v225 = vld [vmem:[%s182] sm:$0xff]
        %v226 = vld [vmem:[%s182 + $0x10] sm:$0xff]
        %v227 = vld [vmem:[%s182 + $0x20] sm:$0xff]
        %v228 = vld [vmem:[%s182 + $0x30] sm:$0xff]
        %v229 = vld [vmem:[%s182 + $0x40] sm:$0xff]
        %v230 = vld [vmem:[%s182 + $0x50] sm:$0xff]
        %v231 = vld [vmem:[%s182 + $0x60] sm:$0xff]
        %v232 = vld [vmem:[%s182 + $0x70] sm:$0xff]
        %v233 = vld [vmem:[%s182 + $0x8] sm:$0xff]
        %v234 = vld [vmem:[%s182 + $0x18] sm:$0xff]
        %v235 = vld [vmem:[%s182 + $0x28] sm:$0xff]
        %v236 = vld [vmem:[%s182 + $0x38] sm:$0xff]
        %v237 = vld [vmem:[%s182 + $0x48] sm:$0xff]
        %v238 = vld [vmem:[%s182 + $0x58] sm:$0xff]
        %v239 = vld [vmem:[%s182 + $0x68] sm:$0xff]
        %v240 = vld [vmem:[%s182 + $0x78] sm:$0xff]
        %v241 = vadd.f32 %v225, %v233
        %v242 = vadd.f32 %v226, %v234
        %v243 = vadd.f32 %v227, %v235
        %v244 = vadd.f32 %v228, %v236
        %v245 = vadd.f32 %v229, %v237
        %v246 = vadd.f32 %v230, %v238
        %v247 = vadd.f32 %v231, %v239
        %v248 = vadd.f32 %v232, %v240
        %v249 = vmax.f32 %v225, %v233
        %v250 = vmax.f32 %v226, %v234
        %v251 = vmax.f32 %v227, %v235
        %v252 = vmax.f32 %v228, %v236
        %v253 = vmax.f32 %v229, %v237
        %v254 = vmax.f32 %v230, %v238
        %v255 = vmax.f32 %v231, %v239
        %v256 = vmax.f32 %v232, %v240
        %v257 = vld [vmem:[#allocation2] sm:$0xff]
        %v258 = vld [vmem:[#allocation2 + $0x8] sm:$0xff]
        %v259 = vld [vmem:[#allocation2 + $0x10] sm:$0xff]
        %v260 = vld [vmem:[#allocation2 + $0x18] sm:$0xff]
        %v261 = vld [vmem:[#allocation2 + $0x20] sm:$0xff]
        %v262 = vld [vmem:[#allocation2 + $0x28] sm:$0xff]
        %v263 = vld [vmem:[#allocation2 + $0x30] sm:$0xff]
        %v264 = vld [vmem:[#allocation2 + $0x38] sm:$0xff]
        %v265 = vadd.f32 %v257, %v241
        %v266 = vadd.f32 %v258, %v242
        %v267 = vadd.f32 %v259, %v243
        %v268 = vadd.f32 %v260, %v244
        %v269 = vadd.f32 %v261, %v245
        %v270 = vadd.f32 %v262, %v246
        %v271 = vadd.f32 %v263, %v247
        %v272 = vadd.f32 %v264, %v248
        %273 = vst [vmem:[#allocation2] sm:$0xff] %v265
        %274 = vst [vmem:[#allocation2 + $0x8] sm:$0xff] %v266
        %275 = vst [vmem:[#allocation2 + $0x10] sm:$0xff] %v267
        %276 = vst [vmem:[#allocation2 + $0x18] sm:$0xff] %v268
        %277 = vst [vmem:[#allocation2 + $0x20] sm:$0xff] %v269
        %278 = vst [vmem:[#allocation2 + $0x28] sm:$0xff] %v270
        %279 = vst [vmem:[#allocation2 + $0x30] sm:$0xff] %v271
        %280 = vst [vmem:[#allocation2 + $0x38] sm:$0xff] %v272
        %v281 = vld [vmem:[#allocation3] sm:$0xff]
        %v282 = vld [vmem:[#allocation3 + $0x8] sm:$0xff]
        %v283 = vld [vmem:[#allocation3 + $0x10] sm:$0xff]
        %v284 = vld [vmem:[#allocation3 + $0x18] sm:$0xff]
        %v285 = vld [vmem:[#allocation3 + $0x20] sm:$0xff]
        %v286 = vld [vmem:[#allocation3 + $0x28] sm:$0xff]
        %v287 = vld [vmem:[#allocation3 + $0x30] sm:$0xff]
        %v288 = vld [vmem:[#allocation3 + $0x38] sm:$0xff]
        %v289 = vmax.f32 %v281, %v249
        %v290 = vmax.f32 %v282, %v250
        %v291 = vmax.f32 %v283, %v251
        %v292 = vmax.f32 %v284, %v252
        %v293 = vmax.f32 %v285, %v253
        %v294 = vmax.f32 %v286, %v254
        %v295 = vmax.f32 %v287, %v255
        %v296 = vmax.f32 %v288, %v256
        %297 = vst [vmem:[#allocation3] sm:$0xff] %v289
        %298 = vst [vmem:[#allocation3 + $0x8] sm:$0xff] %v290
        %299 = vst [vmem:[#allocation3 + $0x10] sm:$0xff] %v291
        %300 = vst [vmem:[#allocation3 + $0x18] sm:$0xff] %v292
        %301 = vst [vmem:[#allocation3 + $0x20] sm:$0xff] %v293
        %302 = vst [vmem:[#allocation3 + $0x28] sm:$0xff] %v294
        %303 = vst [vmem:[#allocation3 + $0x30] sm:$0xff] %v295
        %304 = vst [vmem:[#allocation3 + $0x38] sm:$0xff] %v296
        // Predicated region
        $region41: #{tpu_custom_call.1} parent=31 // pred_check
          %p305 = pneg %p205
        $region42: #{tpu_custom_call.1} parent=31 // pred_check_branch
          %307 = sbr.rel (%p305) target = $region44
        $region43: #{tpu_custom_call.1} parent=31 // pred_region
          %v308 = vld [vmem:[#allocation2] sm:$0xff]
          %v309 = vld [vmem:[#allocation2 + $0x8] sm:$0xff]
          %v310 = vld [vmem:[#allocation2 + $0x10] sm:$0xff]
          %v311 = vld [vmem:[#allocation2 + $0x18] sm:$0xff]
          %v312 = vld [vmem:[#allocation2 + $0x20] sm:$0xff]
          %v313 = vld [vmem:[#allocation2 + $0x28] sm:$0xff]
          %v314 = vld [vmem:[#allocation2 + $0x30] sm:$0xff]
          %v315 = vld [vmem:[#allocation2 + $0x38] sm:$0xff]
          %316 = vadd.xlane.f32.xlu0 %v308
          %v317 = vpop.xlane.xlu0 %316
          %318 = vadd.xlane.f32.xlu0 %v309
          %v319 = vpop.xlane.xlu0 %318
          %320 = vadd.xlane.f32.xlu0 %v310
          %v321 = vpop.xlane.xlu0 %320
          %322 = vadd.xlane.f32.xlu0 %v311
          %v323 = vpop.xlane.xlu0 %322
          %324 = vadd.xlane.f32.xlu0 %v312
          %v325 = vpop.xlane.xlu0 %324
          %326 = vadd.xlane.f32.xlu0 %v313
          %v327 = vpop.xlane.xlu0 %326
          %328 = vadd.xlane.f32.xlu0 %v314
          %v329 = vpop.xlane.xlu0 %328
          %330 = vadd.xlane.f32.xlu0 %v315
          %v331 = vpop.xlane.xlu0 %330
          %v332 = vmul.f32 %v317, 0.00390625
          %v333 = vmul.f32 %v319, 0.00390625
          %v334 = vmul.f32 %v321, 0.00390625
          %v335 = vmul.f32 %v323, 0.00390625
          %v336 = vmul.f32 %v325, 0.00390625
          %v337 = vmul.f32 %v327, 0.00390625
          %v338 = vmul.f32 %v329, 0.00390625
          %v339 = vmul.f32 %v331, 0.00390625
          %v340 = vld [vmem:[#allocation3] sm:$0xff]
          %v341 = vld [vmem:[#allocation3 + $0x8] sm:$0xff]
          %v342 = vld [vmem:[#allocation3 + $0x10] sm:$0xff]
          %v343 = vld [vmem:[#allocation3 + $0x18] sm:$0xff]
          %v344 = vld [vmem:[#allocation3 + $0x20] sm:$0xff]
          %v345 = vld [vmem:[#allocation3 + $0x28] sm:$0xff]
          %v346 = vld [vmem:[#allocation3 + $0x30] sm:$0xff]
          %v347 = vld [vmem:[#allocation3 + $0x38] sm:$0xff]
          %348 = vmax.xlane.f32.xlu0 %v340
          %v349 = vpop.xlane.xlu0 %348
          %350 = vmax.xlane.f32.xlu0 %v341
          %v351 = vpop.xlane.xlu0 %350
          %352 = vmax.xlane.f32.xlu0 %v342
          %v353 = vpop.xlane.xlu0 %352
          %354 = vmax.xlane.f32.xlu0 %v343
          %v355 = vpop.xlane.xlu0 %354
          %356 = vmax.xlane.f32.xlu0 %v344
          %v357 = vpop.xlane.xlu0 %356
          %358 = vmax.xlane.f32.xlu0 %v345
          %v359 = vpop.xlane.xlu0 %358
          %360 = vmax.xlane.f32.xlu0 %v346
          %v361 = vpop.xlane.xlu0 %360
          %362 = vmax.xlane.f32.xlu0 %v347
          %v363 = vpop.xlane.xlu0 %362
          %v364 = vld [vmem:[%s1] sm:$0xff]
          %v365 = vld [vmem:[%s1 + $0x8] sm:$0xff]
          %v366 = vld [vmem:[%s1 + $0x10] sm:$0xff]
          %v367 = vld [vmem:[%s1 + $0x18] sm:$0xff]
          %v368 = vld [vmem:[%s1 + $0x20] sm:$0xff]
          %v369 = vld [vmem:[%s1 + $0x28] sm:$0xff]
          %v370 = vld [vmem:[%s1 + $0x30] sm:$0xff]
          %v371 = vld [vmem:[%s1 + $0x38] sm:$0xff]
          %v380 = vlaneseq
          %v381 = vand.u32 %v380, 127
          %v382 = vlaneseq
          %v383 = vshrl.u32 %v382, 7
          %v384 = vsub.s32 %v381, %v383
          %v385 = vrot.slane %v332, %v384
          %v386 = vadd.s32 %v381, 4294967288
          %v387 = vlaneseq
          %v388 = vshrl.u32 %v387, 7
          %v389 = vsub.s32 %v386, %v388
          %v390 = vrot.slane %v333, %v389
          %vm391 = vcmask 130112
          %v392 = vsel %vm391, %v390, %v385
          %v393 = vadd.s32 %v381, 4294967280
          %v394 = vlaneseq
          %v395 = vshrl.u32 %v394, 7
          %v396 = vsub.s32 %v393, %v395
          %v397 = vrot.slane %v334, %v396
          %vm398 = vcmask 195712
          %v399 = vsel %vm398, %v397, %v392
          %v400 = vadd.s32 %v381, 4294967272
          %v401 = vlaneseq
          %v402 = vshrl.u32 %v401, 7
          %v403 = vsub.s32 %v400, %v402
          %v404 = vrot.slane %v335, %v403
          %vm405 = vcmask 261312
          %v406 = vsel %vm405, %v404, %v399
          %v407 = vadd.s32 %v381, 4294967264
          %v408 = vlaneseq
          %v409 = vshrl.u32 %v408, 7
          %v410 = vsub.s32 %v407, %v409
          %v411 = vrot.slane %v336, %v410
          %vm412 = vcmask 326912
          %v413 = vsel %vm412, %v411, %v406
          %v414 = vadd.s32 %v381, 4294967256
          %v415 = vlaneseq
          %v416 = vshrl.u32 %v415, 7
          %v417 = vsub.s32 %v414, %v416
          %v418 = vrot.slane %v337, %v417
          %vm419 = vcmask 392512
          %v420 = vsel %vm419, %v418, %v413
          %v421 = vadd.s32 %v381, 4294967248
          %v422 = vlaneseq
          %v423 = vshrl.u32 %v422, 7
          %v424 = vsub.s32 %v421, %v423
          %v425 = vrot.slane %v338, %v424
          %vm426 = vcmask 458112
          %v427 = vsel %vm426, %v425, %v420
          %v428 = vadd.s32 %v381, 4294967240
          %v429 = vlaneseq
          %v430 = vshrl.u32 %v429, 7
          %v431 = vsub.s32 %v428, %v430
          %v432 = vrot.slane %v339, %v431
          %vm433 = vcmask 523712
          %v434 = vsel %vm433, %v432, %v427
          %vm435 = vcmask 523264
          %v436 = vsel %vm435, %v434, 0
          %438 = vmatprep.subr.mxu0 0.0
          %439 = vmatpush1.msra.mxu0 0.0
          %440 = vmatprep.subr.mxu0 0.0
          %441 = vmatpush1.msra.mxu0 0.0
          %442 = vmatprep.subr.mxu0 0.0
          %443 = vmatpush1.msra.mxu0 0.0
          %444 = vmatprep.subr.mxu0 0.0
          %445 = vmatpush1.msra.mxu0 0.0
          %446 = vmatprep.subr.mxu0 0.0
          %447 = vmatpush1.msra.mxu0 0.0
          %448 = vmatprep.subr.mxu0 0.0
          %449 = vmatpush1.msra.mxu0 0.0
          %450 = vmatprep.subr.mxu0 0.0
          %451 = vmatpush1.msra.mxu0 0.0
          %452 = vmatprep.subr.mxu0 0.0
          %453 = vmatpush1.msra.mxu0 0.0
          %454 = vmatprep.subr.mxu0 0.0
          %455 = vmatpush1.msra.mxu0 %v371
          %456 = vmatprep.subr.mxu0 0.0
          %457 = vmatpush1.msra.mxu0 %v370
          %458 = vmatprep.subr.mxu0 0.0
          %459 = vmatpush1.msra.mxu0 %v369
          %460 = vmatprep.subr.mxu0 0.0
          %461 = vmatpush1.msra.mxu0 %v368
          %462 = vmatprep.subr.mxu0 0.0
          %463 = vmatpush1.msra.mxu0 %v367
          %464 = vmatprep.subr.mxu0 0.0
          %465 = vmatpush1.msra.mxu0 %v366
          %466 = vmatprep.subr.mxu0 0.0
          %467 = vmatpush1.msra.mxu0 %v365
          %468 = vmatprep.subr.mxu0 0.0
          %469 = vmatpush1.msra.mxu0 %v364
          %470 = vmatprep.subr.mxu0 0.0
          %471 = vmatpush2.msra.mxu0 0.0
          %472 = vmatprep.subr.mxu0 0.0
          %473 = vmatpush2.msra.mxu0 0.0
          %474 = vmatprep.subr.mxu0 0.0
          %475 = vmatpush2.msra.mxu0 0.0
          %476 = vmatprep.subr.mxu0 0.0
          %477 = vmatpush2.msra.mxu0 0.0
          %478 = vmatprep.subr.mxu0 0.0
          %479 = vmatpush2.msra.mxu0 0.0
          %480 = vmatprep.subr.mxu0 0.0
          %481 = vmatpush2.msra.mxu0 0.0
          %482 = vmatprep.subr.mxu0 0.0
          %483 = vmatpush2.msra.mxu0 0.0
          %484 = vmatprep.subr.mxu0 0.0
          %485 = vmatpush2.msra.mxu0 0.0
          %486 = vmatprep.subr.mxu0 0.0
          %487 = vmatpush2.msra.mxu0 0.0
          %488 = vmatprep.subr.mxu0 0.0
          %489 = vmatpush2.msra.mxu0 0.0
          %490 = vmatprep.subr.mxu0 0.0
          %491 = vmatpush2.msra.mxu0 0.0
          %492 = vmatprep.subr.mxu0 0.0
          %493 = vmatpush2.msra.mxu0 0.0
          %494 = vmatprep.subr.mxu0 0.0
          %495 = vmatpush2.msra.mxu0 0.0
          %496 = vmatprep.subr.mxu0 0.0
          %497 = vmatpush2.msra.mxu0 0.0
          %498 = vmatprep.subr.mxu0 0.0
          %499 = vmatpush2.msra.mxu0 0.0
          %500 = vmatprep.subr.mxu0 0.0
          %501 = vmatpush2.msra.mxu0 0.0
          %502 = vmatprep.mubr.f32.mxu0 0.0
          %503 = vmatmul.mubr.f32.gmra.mxu0 %v436
          %v504 = vpop.f32.mrf.mxu0
          %v505 = vadd.f32 0.0, %v504
          %v506 = vpop.f32.mrf.mxu0
          %507 = vdwg.mxu0
          %v508 = vmax.f32 %v505, 0.0
          %v517 = vlaneseq
          %v518 = vshrl.u32 %v517, 7
          %v519 = vsub.s32 %v381, %v518
          %v520 = vrot.slane %v349, %v519
          %v521 = vlaneseq
          %v522 = vshrl.u32 %v521, 7
          %v523 = vsub.s32 %v386, %v522
          %v524 = vrot.slane %v351, %v523
          %v525 = vsel %vm391, %v524, %v520
          %v526 = vlaneseq
          %v527 = vshrl.u32 %v526, 7
          %v528 = vsub.s32 %v393, %v527
          %v529 = vrot.slane %v353, %v528
          %v530 = vsel %vm398, %v529, %v525
          %v531 = vlaneseq
          %v532 = vshrl.u32 %v531, 7
          %v533 = vsub.s32 %v400, %v532
          %v534 = vrot.slane %v355, %v533
          %v535 = vsel %vm405, %v534, %v530
          %v536 = vlaneseq
          %v537 = vshrl.u32 %v536, 7
          %v538 = vsub.s32 %v407, %v537
          %v539 = vrot.slane %v357, %v538
          %v540 = vsel %vm412, %v539, %v535
          %v541 = vlaneseq
          %v542 = vshrl.u32 %v541, 7
          %v543 = vsub.s32 %v414, %v542
          %v544 = vrot.slane %v359, %v543
          %v545 = vsel %vm419, %v544, %v540
          %v546 = vlaneseq
          %v547 = vshrl.u32 %v546, 7
          %v548 = vsub.s32 %v421, %v547
          %v549 = vrot.slane %v361, %v548
          %v550 = vsel %vm426, %v549, %v545
          %v551 = vlaneseq
          %v552 = vshrl.u32 %v551, 7
          %v553 = vsub.s32 %v428, %v552
          %v554 = vrot.slane %v363, %v553
          %v555 = vsel %vm433, %v554, %v550
          %v556 = vsel %vm435, %v555, 0
          %558 = vmatprep.subr.mxu0 0.0
          %559 = vmatpush1.msra.mxu0 0.0
          %560 = vmatprep.subr.mxu0 0.0
          %561 = vmatpush1.msra.mxu0 0.0
          %562 = vmatprep.subr.mxu0 0.0
          %563 = vmatpush1.msra.mxu0 0.0
          %564 = vmatprep.subr.mxu0 0.0
          %565 = vmatpush1.msra.mxu0 0.0
          %566 = vmatprep.subr.mxu0 0.0
          %567 = vmatpush1.msra.mxu0 0.0
          %568 = vmatprep.subr.mxu0 0.0
          %569 = vmatpush1.msra.mxu0 0.0
          %570 = vmatprep.subr.mxu0 0.0
          %571 = vmatpush1.msra.mxu0 0.0
          %572 = vmatprep.subr.mxu0 0.0
          %573 = vmatpush1.msra.mxu0 0.0
          %574 = vmatprep.subr.mxu0 0.0
          %575 = vmatpush1.msra.mxu0 %v371
          %576 = vmatprep.subr.mxu0 0.0
          %577 = vmatpush1.msra.mxu0 %v370
          %578 = vmatprep.subr.mxu0 0.0
          %579 = vmatpush1.msra.mxu0 %v369
          %580 = vmatprep.subr.mxu0 0.0
          %581 = vmatpush1.msra.mxu0 %v368
          %582 = vmatprep.subr.mxu0 0.0
          %583 = vmatpush1.msra.mxu0 %v367
          %584 = vmatprep.subr.mxu0 0.0
          %585 = vmatpush1.msra.mxu0 %v366
          %586 = vmatprep.subr.mxu0 0.0
          %587 = vmatpush1.msra.mxu0 %v365
          %588 = vmatprep.subr.mxu0 0.0
          %589 = vmatpush1.msra.mxu0 %v364
          %590 = vmatprep.subr.mxu0 0.0
          %591 = vmatpush2.msra.mxu0 0.0
          %592 = vmatprep.subr.mxu0 0.0
          %593 = vmatpush2.msra.mxu0 0.0
          %594 = vmatprep.subr.mxu0 0.0
          %595 = vmatpush2.msra.mxu0 0.0
          %596 = vmatprep.subr.mxu0 0.0
          %597 = vmatpush2.msra.mxu0 0.0
          %598 = vmatprep.subr.mxu0 0.0
          %599 = vmatpush2.msra.mxu0 0.0
          %600 = vmatprep.subr.mxu0 0.0
          %601 = vmatpush2.msra.mxu0 0.0
          %602 = vmatprep.subr.mxu0 0.0
          %603 = vmatpush2.msra.mxu0 0.0
          %604 = vmatprep.subr.mxu0 0.0
          %605 = vmatpush2.msra.mxu0 0.0
          %606 = vmatprep.subr.mxu0 0.0
          %607 = vmatpush2.msra.mxu0 0.0
          %608 = vmatprep.subr.mxu0 0.0
          %609 = vmatpush2.msra.mxu0 0.0
          %610 = vmatprep.subr.mxu0 0.0
          %611 = vmatpush2.msra.mxu0 0.0
          %612 = vmatprep.subr.mxu0 0.0
          %613 = vmatpush2.msra.mxu0 0.0
          %614 = vmatprep.subr.mxu0 0.0
          %615 = vmatpush2.msra.mxu0 0.0
          %616 = vmatprep.subr.mxu0 0.0
          %617 = vmatpush2.msra.mxu0 0.0
          %618 = vmatprep.subr.mxu0 0.0
          %619 = vmatpush2.msra.mxu0 0.0
          %620 = vmatprep.subr.mxu0 0.0
          %621 = vmatpush2.msra.mxu0 0.0
          %622 = vmatprep.mubr.f32.mxu0 0.0
          %623 = vmatmul.mubr.f32.gmra.mxu0 %v556
          %v624 = vpop.f32.mrf.mxu0
          %v625 = vadd.f32 0.0, %v624
          %v626 = vpop.f32.mrf.mxu0
          %627 = vdwg.mxu0
          %v628 = vmax.f32 %v625, 0.0
          %v629 = vld [vmem:[%s2] sm:$0xf]
          %vm630 = vcmask 31744
          %v632 = vsel %vm630, %v628, 0
          %vm634 = vcmask 1043456
          %v636 = vsel %vm634, %v629, 0
          %638 = vmatprep.subr.mxu0 0.0
          %639 = vmatpush1.msra.mxu0 0.0
          %640 = vmatprep.subr.mxu0 0.0
          %641 = vmatpush1.msra.mxu0 0.0
          %642 = vmatprep.subr.mxu0 0.0
          %643 = vmatpush1.msra.mxu0 0.0
          %644 = vmatprep.subr.mxu0 0.0
          %645 = vmatpush1.msra.mxu0 0.0
          %646 = vmatprep.subr.mxu0 0.0
          %647 = vmatpush1.msra.mxu0 0.0
          %648 = vmatprep.subr.mxu0 0.0
          %649 = vmatpush1.msra.mxu0 0.0
          %650 = vmatprep.subr.mxu0 0.0
          %651 = vmatpush1.msra.mxu0 0.0
          %652 = vmatprep.subr.mxu0 0.0
          %653 = vmatpush1.msra.mxu0 0.0
          %654 = vmatprep.subr.mxu0 0.0
          %655 = vmatpush1.msra.mxu0 0.0
          %656 = vmatprep.subr.mxu0 0.0
          %657 = vmatpush1.msra.mxu0 0.0
          %658 = vmatprep.subr.mxu0 0.0
          %659 = vmatpush1.msra.mxu0 0.0
          %660 = vmatprep.subr.mxu0 0.0
          %661 = vmatpush1.msra.mxu0 0.0
          %662 = vmatprep.subr.mxu0 0.0
          %663 = vmatpush1.msra.mxu0 0.0
          %664 = vmatprep.subr.mxu0 0.0
          %665 = vmatpush1.msra.mxu0 0.0
          %666 = vmatprep.subr.mxu0 0.0
          %667 = vmatpush1.msra.mxu0 0.0
          %668 = vmatprep.subr.mxu0 0.0
          %669 = vmatpush1.msra.mxu0 %v636
          %670 = vmatprep.subr.mxu0 0.0
          %671 = vmatpush2.msra.mxu0 0.0
          %672 = vmatprep.subr.mxu0 0.0
          %673 = vmatpush2.msra.mxu0 0.0
          %674 = vmatprep.subr.mxu0 0.0
          %675 = vmatpush2.msra.mxu0 0.0
          %676 = vmatprep.subr.mxu0 0.0
          %677 = vmatpush2.msra.mxu0 0.0
          %678 = vmatprep.subr.mxu0 0.0
          %679 = vmatpush2.msra.mxu0 0.0
          %680 = vmatprep.subr.mxu0 0.0
          %681 = vmatpush2.msra.mxu0 0.0
          %682 = vmatprep.subr.mxu0 0.0
          %683 = vmatpush2.msra.mxu0 0.0
          %684 = vmatprep.subr.mxu0 0.0
          %685 = vmatpush2.msra.mxu0 0.0
          %686 = vmatprep.subr.mxu0 0.0
          %687 = vmatpush2.msra.mxu0 0.0
          %688 = vmatprep.subr.mxu0 0.0
          %689 = vmatpush2.msra.mxu0 0.0
          %690 = vmatprep.subr.mxu0 0.0
          %691 = vmatpush2.msra.mxu0 0.0
          %692 = vmatprep.subr.mxu0 0.0
          %693 = vmatpush2.msra.mxu0 0.0
          %694 = vmatprep.subr.mxu0 0.0
          %695 = vmatpush2.msra.mxu0 0.0
          %696 = vmatprep.subr.mxu0 0.0
          %697 = vmatpush2.msra.mxu0 0.0
          %698 = vmatprep.subr.mxu0 0.0
          %699 = vmatpush2.msra.mxu0 0.0
          %700 = vmatprep.subr.mxu0 0.0
          %701 = vmatpush2.msra.mxu0 0.0
          %702 = vmatprep.mubr.f32.mxu0 0.0
          %703 = vmatmul.mubr.f32.gmra.mxu0 %v632
          %v704 = vpop.f32.mrf.mxu0
          %v705 = vadd.f32 0.0, %v704
          %v706 = vpop.f32.mrf.mxu0
          %707 = vdwg.mxu0
          %v709 = vsel %vm630, %v508, 0
          %711 = vmatprep.subr.mxu0 0.0
          %712 = vmatpush1.msra.mxu0 0.0
          %713 = vmatprep.subr.mxu0 0.0
          %714 = vmatpush1.msra.mxu0 0.0
          %715 = vmatprep.subr.mxu0 0.0
          %716 = vmatpush1.msra.mxu0 0.0
          %717 = vmatprep.subr.mxu0 0.0
          %718 = vmatpush1.msra.mxu0 0.0
          %719 = vmatprep.subr.mxu0 0.0
          %720 = vmatpush1.msra.mxu0 0.0
          %721 = vmatprep.subr.mxu0 0.0
          %722 = vmatpush1.msra.mxu0 0.0
          %723 = vmatprep.subr.mxu0 0.0
          %724 = vmatpush1.msra.mxu0 0.0
          %725 = vmatprep.subr.mxu0 0.0
          %726 = vmatpush1.msra.mxu0 0.0
          %727 = vmatprep.subr.mxu0 0.0
          %728 = vmatpush1.msra.mxu0 0.0
          %729 = vmatprep.subr.mxu0 0.0
          %730 = vmatpush1.msra.mxu0 0.0
          %731 = vmatprep.subr.mxu0 0.0
          %732 = vmatpush1.msra.mxu0 0.0
          %733 = vmatprep.subr.mxu0 0.0
          %734 = vmatpush1.msra.mxu0 0.0
          %735 = vmatprep.subr.mxu0 0.0
          %736 = vmatpush1.msra.mxu0 0.0
          %737 = vmatprep.subr.mxu0 0.0
          %738 = vmatpush1.msra.mxu0 0.0
          %739 = vmatprep.subr.mxu0 0.0
          %740 = vmatpush1.msra.mxu0 0.0
          %741 = vmatprep.subr.mxu0 0.0
          %742 = vmatpush1.msra.mxu0 %v636
          %743 = vmatprep.subr.mxu0 0.0
          %744 = vmatpush2.msra.mxu0 0.0
          %745 = vmatprep.subr.mxu0 0.0
          %746 = vmatpush2.msra.mxu0 0.0
          %747 = vmatprep.subr.mxu0 0.0
          %748 = vmatpush2.msra.mxu0 0.0
          %749 = vmatprep.subr.mxu0 0.0
          %750 = vmatpush2.msra.mxu0 0.0
          %751 = vmatprep.subr.mxu0 0.0
          %752 = vmatpush2.msra.mxu0 0.0
          %753 = vmatprep.subr.mxu0 0.0
          %754 = vmatpush2.msra.mxu0 0.0
          %755 = vmatprep.subr.mxu0 0.0
          %756 = vmatpush2.msra.mxu0 0.0
          %757 = vmatprep.subr.mxu0 0.0
          %758 = vmatpush2.msra.mxu0 0.0
          %759 = vmatprep.subr.mxu0 0.0
          %760 = vmatpush2.msra.mxu0 0.0
          %761 = vmatprep.subr.mxu0 0.0
          %762 = vmatpush2.msra.mxu0 0.0
          %763 = vmatprep.subr.mxu0 0.0
          %764 = vmatpush2.msra.mxu0 0.0
          %765 = vmatprep.subr.mxu0 0.0
          %766 = vmatpush2.msra.mxu0 0.0
          %767 = vmatprep.subr.mxu0 0.0
          %768 = vmatpush2.msra.mxu0 0.0
          %769 = vmatprep.subr.mxu0 0.0
          %770 = vmatpush2.msra.mxu0 0.0
          %771 = vmatprep.subr.mxu0 0.0
          %772 = vmatpush2.msra.mxu0 0.0
          %773 = vmatprep.subr.mxu0 0.0
          %774 = vmatpush2.msra.mxu0 0.0
          %775 = vmatprep.mubr.f32.mxu0 0.0
          %776 = vmatmul.mubr.f32.gmra.mxu0 %v709
          %v777 = vpop.f32.mrf.mxu0
          %v778 = vadd.f32 %v705, %v777
          %v779 = vpop.f32.mrf.mxu0
          %780 = vdwg.mxu0
          %v781 = vxor.u32 %v778, 2147483648
          %v782 = vmul.f32 %v781, 1.442695
          %v783 = vpow.pop %v782
          %v784 = vadd.f32 %v783, 1.0
          %v785 = vrcp.pop %v784
          %v786 = vmul.f32 1.0, %v785
          %vm787 = vcmask 516096
          %788 = vst.msk [vmem:[%s203] sm:$0x1] %vm787, %v786
        $region44: #{tpu_custom_call.1} parent=31 // pred_fallthru
          _
        %s789 = sand.u32 %s110, 1
        %s790 = scalar_lea.sflag [#allocation6], %s789
        %s791 = sand.u32 %s110, 1
        %s792 = scalar_lea.vmem [#allocation7], %s791
        // Predicated region
        $region45: #{tpu_custom_call.1} parent=31 // pred_check
          %p793 = pneg %p120
        $region46: #{tpu_custom_call.1} parent=31 // pred_check_branch
          %795 = sbr.rel (%p793) target = $region48
        $region47: #{tpu_custom_call.1} parent=31 // pred_region
          %s797 = ssub.s32 16, 16
          %798 = vsyncadd %s790, %s797
          %s799 = smul.addr %s24, 16
          %s800 = scalar_lea.hbm %s3, %s799
          %s802 = sshll.u32 %s792, 4
          %s803 = int_to_ptr.vmem [resolvable:$true] %s802
          %805 = dma.vmem_to_hbm [thread:$0]  %s803, 16, %s800, %s790
        $region48: #{tpu_custom_call.1} parent=31 // pred_fallthru
          _
      $region32: #{tpu_custom_call.1} parent=5 // pred_fallthru
        _
      %p806 = scmp.le.s32.totalorder 2, %s15
      // Predicated region
      $region49: #{tpu_custom_call.1} parent=5 // pred_check
        %p807 = pneg %p806
      $region50: #{tpu_custom_call.1} parent=5 // pred_check_branch
        %809 = sbr.rel (%p807) target = $region52
      $region51: #{tpu_custom_call.1} parent=5 // pred_region
        %s810 = ssub.s32 %s15, 2
        // Predicated region
        $region53: #{tpu_custom_call.1} parent=51 // pred_check
          %p811 = pneg %p126
        $region54: #{tpu_custom_call.1} parent=51 // pred_check_branch
          %813 = sbr.rel (%p811) target = $region56
        $region55: #{tpu_custom_call.1} parent=51 // pred_region
          %s814 = sand.u32 %s111, 1
          %s815 = scalar_lea.sflag [#allocation6], %s814
          %s816 = sand.u32 %s111, 1
          %s817 = scalar_lea.vmem [#allocation7], %s816
          %818 = dma.done %s815, 16
        $region56: #{tpu_custom_call.1} parent=51 // pred_fallthru
          _
      $region52: #{tpu_custom_call.1} parent=5 // pred_fallthru
        _
    $region6: #{tpu_custom_call.1} parent=1 // loop_footer
      %s19 = sadd.s32 1, %s15
    $region7: #{tpu_custom_call.1} parent=1 // loop_footer_branch
      %14 = sbr.rel target = $region3
    $region8: #{tpu_custom_call.1} parent=1 // loop_exit
      _
    %819 = vsyncpa [#allocation5], 1
    %s820 = scalar_lea.sflag [#allocation5], 1
    %821 = vsyncpa %s820, 1
    %822 = vsyncpa [#allocation6], 1
    %s823 = scalar_lea.sflag [#allocation6], 1
    %824 = vsyncpa %s823, 1

</llo_original>
